<compile_context>
chip_gen: v7x
topology: tpu7x:2x2x1
jax: 0.10.0
libtpu: 0.0.40
codegen_flags: <defaults>
</compile_context>

<pallas_src>
import functools
import math

import jax
import jax.numpy as jnp
from jax.experimental import pallas as pl
from jax.experimental.pallas import tpu as pltpu


def _fused_patch_conv_kernel(x_ref, w_ref, b_ref, o_ref, *, k, compute_dtype):
    # x_ref: (th, k, Wp, k*Cin)  native-dtype input rows (th row-groups, all k taps)
    # w_ref: (k, k*Cin, Cout)    per-row-tap folded conv weight
    # b_ref: (1, Cout)           bias, f32
    # o_ref: (th*Wp, Cout)       output rows
    xv = x_ref[...]                                   # whole tile already in VMEM
    if compute_dtype is not None and xv.dtype != compute_dtype:
        xv = xv.astype(compute_dtype)                 # in-kernel cast: VPU, free (HBM-bound op)
    th, _, wp, kcin = xv.shape
    rows = th * wp
    acc = None
    for kh in range(k):                               # static, unrolled over row taps
        xs = xv[:, kh, :, :].reshape(rows, kcin)      # sublane-aligned merge (Wp | 8 by tile choice)
        p = jnp.dot(xs, w_ref[kh], preferred_element_type=jnp.float32)
        acc = p if acc is None else acc + p
    o_ref[...] = (acc + b_ref[...]).astype(o_ref.dtype)


def _rup(x, m):
    return ((x + m - 1) // m) * m


def _padded_vmem_bytes(shape, dtype):
    """Approximate VMEM footprint of an array with (sublane, lane) tile padding."""
    itemsize = jnp.dtype(dtype).itemsize
    sub = max(8, 32 // itemsize)
    if len(shape) == 1:
        padded = (_rup(shape[0], 128),)
    else:
        padded = tuple(shape[:-2]) + (_rup(shape[-2], sub), _rup(shape[-1], 128))
    n = 1
    for d in padded:
        n *= d
    return n * itemsize


def _choose_row_tile(BHp, Wp, kCin, Cout, k, x_dtype, w_dtype, out_dtype,
                     vmem_budget_bytes):
    # Output block is (th*Wp, Cout); its sublane dim must be 8-aligned unless it
    # covers the whole array, so th must be a multiple of g.
    g = 8 // math.gcd(Wp, 8)
    if g >= BHp:
        return BHp                                    # single full-extent block

    w_bytes = _padded_vmem_bytes((k, kCin, Cout), w_dtype)
    b_bytes = _padded_vmem_bytes((1, Cout), jnp.float32)

    def working_set(t):
        in_b = _padded_vmem_bytes((t, k, Wp, kCin), x_dtype)
        out_b = _padded_vmem_bytes((t * Wp, Cout), out_dtype)
        # in/out tiles are double-buffered; weight/bias allocated x2 as well
        # (constant index map -> no re-DMA, just allocation).
        return 2 * (in_b + out_b) + 2 * (w_bytes + b_bytes)

    # Target ~1024 output rows / step (~85% of HBM roofline in measurements).
    th = max(1, 1024 // max(Wp, 1))
    if BHp >= 2 * g:
        th = min(th, BHp // 2)                        # >= 2 steps for megacore sharding
    th = min(th, BHp)
    th = max(g, (th // g) * g)
    while th > g and working_set(th) > vmem_budget_bytes:
        th = max(g, ((th // 2) // g) * g)
    return th


def var_stream_downsampling_block(
    x1, x2, conv_weight, conv_bias, *, input_patches_shape, kernel_size,
    compute_dtype=None,
):
    """Forward pass of VarStreamDownSamplingBlock.

    x1: (B, N, dim_in), N = H*W;  x2: passed through unchanged.
    conv_weight: (dim_out, dim_in, k, k)  (PyTorch Conv2d layout)
    conv_bias:   (dim_out,)
    compute_dtype: optional MXU compute dtype (e.g. jnp.bfloat16); None = native.
    returns (y1, x2) with y1: (B, (H//k)*(W//k), dim_out), dtype == x1.dtype.
    """
    H, W = input_patches_shape
    k = kernel_size
    B, N, Cin = x1.shape
    Cout = conv_weight.shape[0]
    assert N == H * W
    Hp, Wp = H // k, W // k
    kCin = k * Cin
    out_dtype = x1.dtype
    w_dtype = compute_dtype if compute_dtype is not None else x1.dtype

    # ---- free view of x1 (no HBM transpose / no dtype pass): (B,N,Cin) -> (B*Hp,k,Wp,k*Cin) ----
    if H % k != 0 or W % k != 0:
        # stride==kernel conv drops the ragged border; crop (copy only in this edge case)
        x_view = x1.reshape(B, H, W, Cin)[:, : Hp * k, : Wp * k, :]
        x_view = x_view.reshape(B * Hp, k, Wp, kCin)
    else:
        x_view = x1.reshape(B * Hp, k, Wp, kCin)

    # Fold conv weight (Cout, Cin, kh, kw) -> per-row-tap (k, kw*Cin, Cout);
    # column order within a tap is (kw, Cin), matching x_view's last axis.
    w_taps = conv_weight.transpose(2, 3, 1, 0).reshape(k, kCin, Cout).astype(w_dtype)
    bias2d = conv_bias.reshape(1, Cout).astype(jnp.float32)

    BHp = B * Hp
    M = BHp * Wp

    th = _choose_row_tile(
        BHp, Wp, kCin, Cout, k, x_view.dtype, w_dtype, out_dtype,
        vmem_budget_bytes=30 * 1024 * 1024,
    )
    n_blocks = pl.cdiv(BHp, th)

    cost = pl.CostEstimate(
        flops=2 * M * (k * kCin) * Cout,
        transcendentals=0,
        bytes_accessed=(
            x_view.size * jnp.dtype(x_view.dtype).itemsize
            + w_taps.size * jnp.dtype(w_dtype).itemsize
            + Cout * 4
            + M * Cout * jnp.dtype(out_dtype).itemsize
        ),
    )

    kernel = functools.partial(_fused_patch_conv_kernel, k=k, compute_dtype=compute_dtype)
    out_flat = pl.pallas_call(
        kernel,
        out_shape=jax.ShapeDtypeStruct((M, Cout), out_dtype),
        grid_spec=pltpu.PrefetchScalarGridSpec(
            num_scalar_prefetch=0,
            grid=(n_blocks,),
            in_specs=[
                pl.BlockSpec((th, k, Wp, kCin), lambda i: (i, 0, 0, 0)),
                pl.BlockSpec((k, kCin, Cout), lambda i: (0, 0, 0)),
                pl.BlockSpec((1, Cout), lambda i: (0, 0)),
            ],
            out_specs=pl.BlockSpec((th * Wp, Cout), lambda i: (i, 0)),
        ),
        compiler_params=pltpu.CompilerParams(
            dimension_semantics=("parallel",),
            vmem_limit_bytes=48 * 1024 * 1024,   # < 64 MiB (v7x physical), > 32 MiB default
        ),
        cost_estimate=cost,
    )(x_view, w_taps, bias2d)

    # (B*Hp*Wp, Cout) -> (B, Hp*Wp, Cout); row ordering already h'*Wp + w'.
    y1 = out_flat.reshape(B, Hp * Wp, Cout)
    return y1, x2


if __name__ == "__main__":
    # Small shapes consistent with the module.
    B = 2
    H, W = 16, 16          # input_patches_shape
    k = 2                  # kernel_size
    dim_in = 4
    dim_out = 8
    N = H * W

    key = jax.random.PRNGKey(0)
    k1, k2, k3, k4 = jax.random.split(key, 4)

    x1 = jax.random.normal(k1, (B, N, dim_in), dtype=jnp.float32)
    x2 = jax.random.normal(k2, (B, N, dim_in), dtype=jnp.float32)
    conv_weight = jax.random.normal(k3, (dim_out, dim_in, k, k), dtype=jnp.float32) * 0.1
    conv_bias = jax.random.normal(k4, (dim_out,), dtype=jnp.float32) * 0.1

    fwd = jax.jit(functools.partial(
        var_stream_downsampling_block,
        input_patches_shape=(H, W), kernel_size=k,
    ))
    fwd_bf16 = jax.jit(functools.partial(
        var_stream_downsampling_block,
        input_patches_shape=(H, W), kernel_size=k, compute_dtype=jnp.bfloat16,
    ))

    # Default path: native (f32) compute, tight numerical check.
    y1_f32, y2 = fwd(x1, x2, conv_weight, conv_bias)
    # bf16-MXU path, loose check.
    y1_bf16, _ = fwd_bf16(x1, x2, conv_weight, conv_bias)
    jax.block_until_ready((y1_f32, y1_bf16, y2))

    # Pure-JAX conv reference (NCHW, like PyTorch).
    x_nchw = x1.transpose(0, 2, 1).reshape(B, dim_in, H, W)
    ref = jax.lax.conv_general_dilated(
        x_nchw, conv_weight, window_strides=(k, k), padding="VALID",
        dimension_numbers=("NCHW", "OIHW", "NCHW"),
    ) + conv_bias.reshape(1, dim_out, 1, 1)
    ref = ref.reshape(B, dim_out, -1).transpose(0, 2, 1)

    assert y1_f32.shape == (B, (H // k) * (W // k), dim_out)
    assert y1_f32.dtype == x1.dtype
    assert jnp.allclose(y1_f32, ref, atol=1e-4, rtol=1e-4)      # native-compute path
    assert jnp.allclose(y1_bf16, ref, atol=5e-2, rtol=5e-2)     # bf16-compute path
    assert jnp.array_equal(y2, x2)

    print("KERNEL_OK")
</pallas_src>

<mosaic_0001>
module attributes {stable_mosaic.version = 11 : i64} {
  func.func @_fused_patch_conv_kernel(%arg0: i32, %arg1: memref<8x2x8x8xf32, #tpu.memory_space<vmem>>, %arg2: memref<2x8x8xf32, #tpu.memory_space<vmem>>, %arg3: memref<1x8xf32, #tpu.memory_space<vmem>>, %arg4: memref<64x8xf32, #tpu.memory_space<vmem>>) attributes {dimension_semantics = [#tpu.dimension_semantics<parallel>], iteration_bounds = array<i64: 2>, scalar_prefetch = 0 : i64, scratch_operands = 0 : i64, tpu.core_type = #tpu.core_type<tc>, window_params = [{transform_indices = @transform_0, window_bounds = array<i64: 8, 2, 8, 8>}, {pipeline_mode = #tpu.pipeline_mode<synchronous>, transform_indices = @transform_1, window_bounds = array<i64: 2, 8, 8>}, {pipeline_mode = #tpu.pipeline_mode<synchronous>, transform_indices = @transform_2, window_bounds = array<i64: 1, 8>}, {transform_indices = @transform_3, window_bounds = array<i64: 64, 8>}]} {
    %c0 = arith.constant 0 : index
    %c0_0 = arith.constant 0 : index
    %c0_1 = arith.constant 0 : index
    %c0_2 = arith.constant 0 : index
    %0 = vector.load %arg1[%c0, %c0_0, %c0_1, %c0_2] : memref<8x2x8x8xf32, #tpu.memory_space<vmem>>, vector<8x2x8x8xf32>
    %1 = vector.extract_strided_slice %0 {offsets = [0, 0, 0, 0], sizes = [8, 1, 8, 8], strides = [1, 1, 1, 1]} : vector<8x2x8x8xf32> to vector<8x1x8x8xf32>
    %2 = vector.shape_cast %1 : vector<8x1x8x8xf32> to vector<8x8x8xf32>
    %3 = vector.shape_cast %2 : vector<8x8x8xf32> to vector<64x8xf32>
    %c0_3 = arith.constant 0 : index
    %c0_4 = arith.constant 0 : index
    %c0_5 = arith.constant 0 : index
    %4 = vector.load %arg2[%c0_3, %c0_4, %c0_5] : memref<2x8x8xf32, #tpu.memory_space<vmem>>, vector<1x8x8xf32>
    %5 = vector.shape_cast %4 : vector<1x8x8xf32> to vector<8x8xf32>
    %cst = arith.constant dense<0.000000e+00> : vector<64x8xf32>
    %6 = tpu.matmul %3, %5, %cst {dimension_numbers = #tpu.dot_dimension_numbers<[1], [0], [0], [1], [0, 0, 1, 1], [], []>} : vector<64x8xf32>, vector<8x8xf32>, vector<64x8xf32> -> vector<64x8xf32>
    %7 = vector.extract_strided_slice %0 {offsets = [0, 1, 0, 0], sizes = [8, 1, 8, 8], strides = [1, 1, 1, 1]} : vector<8x2x8x8xf32> to vector<8x1x8x8xf32>
    %8 = vector.shape_cast %7 : vector<8x1x8x8xf32> to vector<8x8x8xf32>
    %9 = vector.shape_cast %8 : vector<8x8x8xf32> to vector<64x8xf32>
    %c1 = arith.constant 1 : index
    %c0_6 = arith.constant 0 : index
    %c0_7 = arith.constant 0 : index
    %10 = vector.load %arg2[%c1, %c0_6, %c0_7] : memref<2x8x8xf32, #tpu.memory_space<vmem>>, vector<1x8x8xf32>
    %11 = vector.shape_cast %10 : vector<1x8x8xf32> to vector<8x8xf32>
    %cst_8 = arith.constant dense<0.000000e+00> : vector<64x8xf32>
    %12 = tpu.matmul %9, %11, %cst_8 {dimension_numbers = #tpu.dot_dimension_numbers<[1], [0], [0], [1], [0, 0, 1, 1], [], []>} : vector<64x8xf32>, vector<8x8xf32>, vector<64x8xf32> -> vector<64x8xf32>
    %13 = arith.addf %6, %12 : vector<64x8xf32>
    %c0_9 = arith.constant 0 : index
    %c0_10 = arith.constant 0 : index
    %14 = vector.load %arg3[%c0_9, %c0_10] : memref<1x8xf32, #tpu.memory_space<vmem>>, vector<1x8xf32>
    %15 = vector.broadcast %14 : vector<1x8xf32> to vector<64x8xf32>
    %16 = arith.addf %13, %15 : vector<64x8xf32>
    %c0_11 = arith.constant 0 : index
    %c0_12 = arith.constant 0 : index
    %17 = vector.load %arg4[%c0_11, %c0_12] : memref<64x8xf32, #tpu.memory_space<vmem>>, vector<64x8xf32>
    tpu.vector_store %arg4[%c0_11, %c0_12], %16 {strides = array<i32>} : memref<64x8xf32, #tpu.memory_space<vmem>>, vector<64x8xf32>,
    return
  }
  func.func @transform_0(%arg0: i32) -> (i32, i32, i32, i32) {
    %c0_i32 = arith.constant 0 : i32
    %c0_i32_0 = arith.constant 0 : i32
    %c0_i32_1 = arith.constant 0 : i32
    %c0_i32_2 = arith.constant 0 : i32
    return %arg0, %c0_i32, %c0_i32_0, %c0_i32_1 : i32, i32, i32, i32
  }
  func.func @transform_1(%arg0: i32) -> (i32, i32, i32) {
    %c0_i32 = arith.constant 0 : i32
    %c0_i32_0 = arith.constant 0 : i32
    %c0_i32_1 = arith.constant 0 : i32
    %c0_i32_2 = arith.constant 0 : i32
    return %c0_i32, %c0_i32_0, %c0_i32_1 : i32, i32, i32
  }
  func.func @transform_2(%arg0: i32) -> (i32, i32) {
    %c0_i32 = arith.constant 0 : i32
    %c0_i32_0 = arith.constant 0 : i32
    %c0_i32_1 = arith.constant 0 : i32
    return %c0_i32, %c0_i32_0 : i32, i32
  }
  func.func @transform_3(%arg0: i32) -> (i32, i32) {
    %c0_i32 = arith.constant 0 : i32
    %c0_i32_0 = arith.constant 0 : i32
    return %arg0, %c0_i32 : i32, i32
  }
}

</mosaic_0001>

<llo_original>
// kernel: var_stream_downsampling_block.1
$region0: #{var_stream_downsampling_block.1}
  #allocation0 [shape = 'u32[]', space=smem, size = 0x4, offset = 0x4, fixed_abs, tag = 'smem constant byte address 0x4 - core index']
  #allocation1 [shape = 'u32[144,128]{1,0:T(1,128)}', space=vmem, size = 0x12000, scoped, tag = 'internal scratch']
  %s0 = inlined_call_operand.vmem [shape: f32[16,2,8,8], index: 0, kind: input, shape index: {}]
  %s1 = inlined_call_operand.vmem [shape: f32[2,8,8], index: 1, kind: input, shape index: {}]
  %s2 = inlined_call_operand.vmem [shape: f32[1,8], index: 2, kind: input, shape index: {}]
  %s3 = inlined_call_operand.vmem [shape: f32[128,8], index: 3, kind: output, shape index: {}]
  %s4 = sld [smem:[#allocation0]]
  $region45: #{var_stream_downsampling_block.1} parent=0
    _
  %s6 = ssub.s32 1, %s4
  %s7 = scalar_select 0, %s6, %s4
  loop: start=0, step=1, limit=4
  $region2: #{var_stream_downsampling_block.1} parent=0 // loop_pre_header
    _
  $region3: #{var_stream_downsampling_block.1} parent=0 // loop_header
    %s9 = sphi 0, %s13
    %p10 = scmp.ge.s32.totalorder %s9, 4
    %s19 = sphi 0, %s21
    %s22 = sphi 0, %s19
    %s23 = sphi 0, %s22
    %s39 = sphi 0, %s23
    %s43 = sphi 0, %s43
    %s45 = sphi 0, %s43
    %s46 = sphi 0, %s45
    %s60 = sphi 0, %s46
    %s64 = sphi 0, %s64
    %s66 = sphi 0, %s64
    %s67 = sphi 0, %s66
    %s81 = sphi 0, %s67
    %s87 = sphi 0, %s89
    %s90 = sphi 0, %s87
    %s91 = sphi 0, %s90
    %s107 = sphi 0, %s91
  $region4: #{var_stream_downsampling_block.1} parent=0 // loop_header_branch
    %12 = sbr.rel (%p10) target = $region8
  $region5: #{var_stream_downsampling_block.1} parent=0 // loop_body
    %s14 = ssub.s32 %s9, 1
    %s15 = ssub.s32 %s9, 2
    %s16 = sadd.s32 %s9, 1
    %s17 = ssub.s32 %s9, %s16
    %p18 = scmp.eq.s32.totalorder %s17, 0
    %s20 = sadd.s32 %s19, 1
    %s21 = scalar_select %p18, %s19, %s20
    %p24 = pneg %p18
    %p25 = scmp.eq.s32.totalorder %s9, 1
    %p26 = por %p24, %p25
    %p27 = scmp.ne.s32.totalorder %s19, %s22
    %p28 = scmp.eq.s32.totalorder %s9, 0
    %p29 = por %p27, %p28
    %p30 = scmp.ne.s32.totalorder %s19, %s22
    %p31 = scmp.eq.s32.totalorder %s14, 1
    %p32 = por %p30, %p31
    %p33 = scmp.ne.s32.totalorder %s22, %s23
    %p34 = scmp.eq.s32.totalorder %s14, 0
    %p35 = por %p33, %p34
    %p36 = scmp.ne.s32.totalorder %s22, %s23
    %p37 = scmp.eq.s32.totalorder %s15, 1
    %p38 = por %p36, %p37
    %p40 = scmp.ne.s32.totalorder %s23, %s39
    %p41 = scmp.eq.s32.totalorder %s15, 0
    %p42 = por %p40, %p41
    %s44 = sadd.s32 %s43, 1
    %p47 = scmp.eq.s32.totalorder %s9, 1
    %p48 = scmp.ne.s32.totalorder %s43, %s45
    %p49 = scmp.eq.s32.totalorder %s9, 0
    %p50 = por %p48, %p49
    %p51 = scmp.ne.s32.totalorder %s43, %s45
    %p52 = scmp.eq.s32.totalorder %s14, 1
    %p53 = por %p51, %p52
    %p54 = scmp.ne.s32.totalorder %s45, %s46
    %p55 = scmp.eq.s32.totalorder %s14, 0
    %p56 = por %p54, %p55
    %p57 = scmp.ne.s32.totalorder %s45, %s46
    %p58 = scmp.eq.s32.totalorder %s15, 1
    %p59 = por %p57, %p58
    %p61 = scmp.ne.s32.totalorder %s46, %s60
    %p62 = scmp.eq.s32.totalorder %s15, 0
    %p63 = por %p61, %p62
    %s65 = sadd.s32 %s64, 1
    %p68 = scmp.eq.s32.totalorder %s9, 1
    %p69 = scmp.ne.s32.totalorder %s64, %s66
    %p70 = scmp.eq.s32.totalorder %s9, 0
    %p71 = por %p69, %p70
    %p72 = scmp.ne.s32.totalorder %s64, %s66
    %p73 = scmp.eq.s32.totalorder %s14, 1
    %p74 = por %p72, %p73
    %p75 = scmp.ne.s32.totalorder %s66, %s67
    %p76 = scmp.eq.s32.totalorder %s14, 0
    %p77 = por %p75, %p76
    %p78 = scmp.ne.s32.totalorder %s66, %s67
    %p79 = scmp.eq.s32.totalorder %s15, 1
    %p80 = por %p78, %p79
    %p82 = scmp.ne.s32.totalorder %s67, %s81
    %p83 = scmp.eq.s32.totalorder %s15, 0
    %p84 = por %p82, %p83
    %s85 = ssub.s32 %s9, %s16
    %p86 = scmp.eq.s32.totalorder %s85, 0
    %s88 = sadd.s32 %s87, 1
    %s89 = scalar_select %p86, %s87, %s88
    %p92 = pneg %p86
    %p93 = scmp.eq.s32.totalorder %s9, 1
    %p94 = por %p92, %p93
    %p95 = scmp.ne.s32.totalorder %s87, %s90
    %p96 = scmp.eq.s32.totalorder %s9, 0
    %p97 = por %p95, %p96
    %p98 = scmp.ne.s32.totalorder %s87, %s90
    %p99 = scmp.eq.s32.totalorder %s14, 1
    %p100 = por %p98, %p99
    %p101 = scmp.ne.s32.totalorder %s90, %s91
    %p102 = scmp.eq.s32.totalorder %s14, 0
    %p103 = por %p101, %p102
    %p104 = scmp.ne.s32.totalorder %s90, %s91
    %p105 = scmp.eq.s32.totalorder %s15, 1
    %p106 = por %p104, %p105
    %p108 = scmp.ne.s32.totalorder %s91, %s107
    %p109 = scmp.eq.s32.totalorder %s15, 0
    %p110 = por %p108, %p109
    %p111 = scmp.le.s32.totalorder 1, %s9
    %p112 = scmp.lt.s32.totalorder %s9, 3
    %p113 = pnand %p111, %p112
    %p114 = pneg %p113
    // Predicated region
    $region9: #{var_stream_downsampling_block.1} parent=5 // pred_check
      _
    $region10: #{var_stream_downsampling_block.1} parent=5 // pred_check_branch
      %116 = sbr.rel (%p113) target = $region12
    $region11: #{var_stream_downsampling_block.1} parent=5 // pred_region
      %s117 = ssub.s32 %s9, 1
      // Predicated region
      $region13: #{var_stream_downsampling_block.1} parent=11 // pred_check
        %p118 = pneg %p56
      $region14: #{var_stream_downsampling_block.1} parent=11 // pred_check_branch
        %120 = sbr.rel (%p118) target = $region16
      $region15: #{var_stream_downsampling_block.1} parent=11 // pred_region
        _
      $region16: #{var_stream_downsampling_block.1} parent=11 // pred_fallthru
        _
      // Predicated region
      $region17: #{var_stream_downsampling_block.1} parent=11 // pred_check
        %p121 = pneg %p77
      $region18: #{var_stream_downsampling_block.1} parent=11 // pred_check_branch
        %123 = sbr.rel (%p121) target = $region20
      $region19: #{var_stream_downsampling_block.1} parent=11 // pred_region
        _
      $region20: #{var_stream_downsampling_block.1} parent=11 // pred_fallthru
        _
    $region12: #{var_stream_downsampling_block.1} parent=5 // pred_fallthru
      _
    %p124 = scmp.lt.s32.totalorder %s9, 2
    // Predicated region
    $region21: #{var_stream_downsampling_block.1} parent=5 // pred_check
      %p125 = pneg %p124
    $region22: #{var_stream_downsampling_block.1} parent=5 // pred_check_branch
      %127 = sbr.rel (%p125) target = $region24
    $region23: #{var_stream_downsampling_block.1} parent=5 // pred_region
      // Predicated region
      $region25: #{var_stream_downsampling_block.1} parent=23 // pred_check
        %p128 = pneg %p29
      $region26: #{var_stream_downsampling_block.1} parent=23 // pred_check_branch
        %130 = sbr.rel (%p128) target = $region28
      $region27: #{var_stream_downsampling_block.1} parent=23 // pred_region
        %s131 = smul.u32 8, %s9
        %p132 = scmp.lt.s32.totalorder %s131, 15
        %s133 = scalar_select %p132, %s131, 15
        %s134 = smul.addr %s133, 2
        %s135 = smul.addr %s134, 8
        %s136 = scalar_lea.vmem %s0, %s135
        %s137 = smul.u32 8, %s9
      $region28: #{var_stream_downsampling_block.1} parent=23 // pred_fallthru
        _
    $region24: #{var_stream_downsampling_block.1} parent=5 // pred_fallthru
      _
    %p138 = scmp.le.s32.totalorder 1, %s9
    %p139 = scmp.lt.s32.totalorder %s9, 3
    %p140 = pnand %p138, %p139
    %p141 = pneg %p140
    // Predicated region
    $region29: #{var_stream_downsampling_block.1} parent=5 // pred_check
      _
    $region30: #{var_stream_downsampling_block.1} parent=5 // pred_check_branch
      %143 = sbr.rel (%p140) target = $region32
    $region31: #{var_stream_downsampling_block.1} parent=5 // pred_region
      %s144 = ssub.s32 %s9, 1
      %s145 = smul.u32 8, %s14
      %p146 = scmp.lt.s32.totalorder %s145, 15
      %s147 = scalar_select %p146, %s145, 15
      %s148 = smul.addr %s147, 2
      %s149 = smul.addr %s148, 8
      %s150 = scalar_lea.vmem %s0, %s149
      %p151 = pneg %p35
      %p152 = pneg %p32
      %p153 = pneg %p56
      %p154 = pneg %p53
      %p155 = pneg %p77
      %p156 = pneg %p74
      %p157 = pneg %p103
      %p158 = pneg %p100
      %s159 = smul.u32 8, %s14
      %p160 = scmp.lt.s32.totalorder %s159, 15
      %s161 = scalar_select %p160, %s159, 15
      %s162 = smul.addr %s161, 8
      %s163 = scalar_lea.vmem %s3, %s162
      %s164 = smul.u32 8, %s14
      %p165 = scmp.lt.s32.totalorder %s164, 15
      %s166 = scalar_select %p165, %s164, 15
      %s167 = smul.addr %s166, 2
      %s168 = smul.addr %s167, 8
      %s169 = scalar_lea.vmem %s0, %s168
      %s170 = smul.u32 8, %s14
      %s171 = smul.u32 8, %s14
      %p172 = scmp.lt.s32.totalorder %s171, 15
      %s173 = scalar_select %p172, %s171, 15
      %s174 = smul.addr %s173, 8
      %s175 = scalar_lea.vmem %s3, %s174
      %s176 = smul.u32 8, %s14
      %v177 = vld [vmem:[%s169] sm:$0xff]
      %v178 = vld [vmem:[%s169 + $0x8] sm:$0xff]
      %v179 = vld [vmem:[%s169 + $0x10] sm:$0xff]
      %v180 = vld [vmem:[%s169 + $0x18] sm:$0xff]
      %v181 = vld [vmem:[%s169 + $0x20] sm:$0xff]
      %v182 = vld [vmem:[%s169 + $0x28] sm:$0xff]
      %v183 = vld [vmem:[%s169 + $0x30] sm:$0xff]
      %v184 = vld [vmem:[%s169 + $0x38] sm:$0xff]
      %v185 = vld [vmem:[%s169 + $0x40] sm:$0xff]
      %v186 = vld [vmem:[%s169 + $0x48] sm:$0xff]
      %v187 = vld [vmem:[%s169 + $0x50] sm:$0xff]
      %v188 = vld [vmem:[%s169 + $0x58] sm:$0xff]
      %v189 = vld [vmem:[%s169 + $0x60] sm:$0xff]
      %v190 = vld [vmem:[%s169 + $0x68] sm:$0xff]
      %v191 = vld [vmem:[%s169 + $0x70] sm:$0xff]
      %v192 = vld [vmem:[%s169 + $0x78] sm:$0xff]
      %v193 = vld [vmem:[%s1] sm:$0xff]
      %s194 = scalar_lea.vmem %s1, 8
      %v195 = vld [vmem:[%s194] sm:$0xff]
      %vm196 = vcmask 64512
      %v198 = vsel %vm196, %v178, 0
      %v201 = vsel %vm196, %v180, 0
      %v204 = vsel %vm196, %v182, 0
      %v207 = vsel %vm196, %v184, 0
      %v210 = vsel %vm196, %v186, 0
      %v213 = vsel %vm196, %v188, 0
      %v216 = vsel %vm196, %v190, 0
      %v219 = vsel %vm196, %v192, 0
      %221 = vmatprep.subr.mxu0 0.0
      %222 = vmatpush1.msra.mxu0 %v195
      %223 = vmatprep.subr.mxu0 0.0
      %224 = vmatpush1.msra.mxu0 0.0
      %225 = vmatprep.subr.mxu0 0.0
      %226 = vmatpush1.msra.mxu0 0.0
      %227 = vmatprep.subr.mxu0 0.0
      %228 = vmatpush1.msra.mxu0 0.0
      %229 = vmatprep.subr.mxu0 0.0
      %230 = vmatpush1.msra.mxu0 0.0
      %231 = vmatprep.subr.mxu0 0.0
      %232 = vmatpush1.msra.mxu0 0.0
      %233 = vmatprep.subr.mxu0 0.0
      %234 = vmatpush1.msra.mxu0 0.0
      %235 = vmatprep.subr.mxu0 0.0
      %236 = vmatpush1.msra.mxu0 0.0
      %237 = vmatprep.subr.mxu0 0.0
      %238 = vmatpush1.msra.mxu0 0.0
      %239 = vmatprep.subr.mxu0 0.0
      %240 = vmatpush1.msra.mxu0 0.0
      %241 = vmatprep.subr.mxu0 0.0
      %242 = vmatpush1.msra.mxu0 0.0
      %243 = vmatprep.subr.mxu0 0.0
      %244 = vmatpush1.msra.mxu0 0.0
      %245 = vmatprep.subr.mxu0 0.0
      %246 = vmatpush1.msra.mxu0 0.0
      %247 = vmatprep.subr.mxu0 0.0
      %248 = vmatpush1.msra.mxu0 0.0
      %249 = vmatprep.subr.mxu0 0.0
      %250 = vmatpush1.msra.mxu0 0.0
      %251 = vmatprep.subr.mxu0 0.0
      %252 = vmatpush1.msra.mxu0 0.0
      %253 = vmatprep.subr.mxu0 0.0
      %254 = vmatpush1.msra.mxu0 0.0
      %255 = vmatprep.subr.mxu0 0.0
      %256 = vmatpush1.msra.mxu0 0.0
      %257 = vmatprep.subr.mxu0 0.0
      %258 = vmatpush1.msra.mxu0 0.0
      %259 = vmatprep.subr.mxu0 0.0
      %260 = vmatpush1.msra.mxu0 0.0
      %261 = vmatprep.subr.mxu0 0.0
      %262 = vmatpush1.msra.mxu0 0.0
      %263 = vmatprep.subr.mxu0 0.0
      %264 = vmatpush1.msra.mxu0 0.0
      %265 = vmatprep.subr.mxu0 0.0
      %266 = vmatpush1.msra.mxu0 0.0
      %267 = vmatprep.subr.mxu0 0.0
      %268 = vmatpush1.msra.mxu0 0.0
      %269 = vmatprep.subr.mxu0 0.0
      %270 = vmatpush1.msra.mxu0 0.0
      %271 = vmatprep.subr.mxu0 0.0
      %272 = vmatpush1.msra.mxu0 0.0
      %273 = vmatprep.subr.mxu0 0.0
      %274 = vmatpush1.msra.mxu0 0.0
      %275 = vmatprep.subr.mxu0 0.0
      %276 = vmatpush1.msra.mxu0 0.0
      %277 = vmatprep.subr.mxu0 0.0
      %278 = vmatpush1.msra.mxu0 0.0
      %279 = vmatprep.subr.mxu0 0.0
      %280 = vmatpush1.msra.mxu0 0.0
      %281 = vmatprep.subr.mxu0 0.0
      %282 = vmatpush1.msra.mxu0 0.0
      %283 = vmatprep.subr.mxu0 0.0
      %284 = vmatpush1.msra.mxu0 0.0
      %285 = vmatprep.mubr.f32.mxu0 0.0
      %286 = vmatmul.mubr.f32.gmra.mrb[0].mxu0 %v198
      %v287 = vpop.f32.mrb[0].mxu0
      %v288 = vadd.f32 0.0, %v287
      %v289 = vpop.f32.mrb[0].mxu0
      %290 = vmatprep.mubr.f32.mxu0 0.0
      %291 = vmatmul.mubr.f32.gmra.mrb[0].mxu0 %v201
      %v292 = vpop.f32.mrb[0].mxu0
      %v293 = vadd.f32 0.0, %v292
      %v294 = vpop.f32.mrb[0].mxu0
      %295 = vmatprep.mubr.f32.mxu0 0.0
      %296 = vmatmul.mubr.f32.gmra.mrb[0].mxu0 %v204
      %v297 = vpop.f32.mrb[0].mxu0
      %v298 = vadd.f32 0.0, %v297
      %v299 = vpop.f32.mrb[0].mxu0
      %300 = vmatprep.mubr.f32.mxu0 0.0
      %301 = vmatmul.mubr.f32.gmra.mrb[0].mxu0 %v207
      %v302 = vpop.f32.mrb[0].mxu0
      %v303 = vadd.f32 0.0, %v302
      %v304 = vpop.f32.mrb[0].mxu0
      %305 = vmatprep.mubr.f32.mxu0 0.0
      %306 = vmatmul.mubr.f32.gmra.mrb[0].mxu0 %v210
      %v307 = vpop.f32.mrb[0].mxu0
      %v308 = vadd.f32 0.0, %v307
      %v309 = vpop.f32.mrb[0].mxu0
      %310 = vmatprep.mubr.f32.mxu0 0.0
      %311 = vmatmul.mubr.f32.gmra.mrb[0].mxu0 %v213
      %v312 = vpop.f32.mrb[0].mxu0
      %v313 = vadd.f32 0.0, %v312
      %v314 = vpop.f32.mrb[0].mxu0
      %315 = vmatprep.mubr.f32.mxu0 0.0
      %316 = vmatmul.mubr.f32.gmra.mrb[0].mxu0 %v216
      %v317 = vpop.f32.mrb[0].mxu0
      %v318 = vadd.f32 0.0, %v317
      %v319 = vpop.f32.mrb[0].mxu0
      %320 = vmatprep.mubr.f32.mxu0 0.0
      %321 = vmatmul.mubr.f32.gmra.mrb[0].mxu0 %v219
      %v322 = vpop.f32.mrb[0].mxu0
      %v323 = vadd.f32 0.0, %v322
      %v324 = vpop.f32.mrb[0].mxu0
      %325 = vdwg.mxu0
      %v327 = vsel %vm196, %v177, 0
      %v330 = vsel %vm196, %v179, 0
      %v333 = vsel %vm196, %v181, 0
      %v336 = vsel %vm196, %v183, 0
      %v339 = vsel %vm196, %v185, 0
      %v342 = vsel %vm196, %v187, 0
      %v345 = vsel %vm196, %v189, 0
      %v348 = vsel %vm196, %v191, 0
      %350 = vmatprep.subr.mxu0 0.0
      %351 = vmatpush1.msra.mxu0 %v193
      %352 = vmatprep.subr.mxu0 0.0
      %353 = vmatpush1.msra.mxu0 0.0
      %354 = vmatprep.subr.mxu0 0.0
      %355 = vmatpush1.msra.mxu0 0.0
      %356 = vmatprep.subr.mxu0 0.0
      %357 = vmatpush1.msra.mxu0 0.0
      %358 = vmatprep.subr.mxu0 0.0
      %359 = vmatpush1.msra.mxu0 0.0
      %360 = vmatprep.subr.mxu0 0.0
      %361 = vmatpush1.msra.mxu0 0.0
      %362 = vmatprep.subr.mxu0 0.0
      %363 = vmatpush1.msra.mxu0 0.0
      %364 = vmatprep.subr.mxu0 0.0
      %365 = vmatpush1.msra.mxu0 0.0
      %366 = vmatprep.subr.mxu0 0.0
      %367 = vmatpush1.msra.mxu0 0.0
      %368 = vmatprep.subr.mxu0 0.0
      %369 = vmatpush1.msra.mxu0 0.0
      %370 = vmatprep.subr.mxu0 0.0
      %371 = vmatpush1.msra.mxu0 0.0
      %372 = vmatprep.subr.mxu0 0.0
      %373 = vmatpush1.msra.mxu0 0.0
      %374 = vmatprep.subr.mxu0 0.0
      %375 = vmatpush1.msra.mxu0 0.0
      %376 = vmatprep.subr.mxu0 0.0
      %377 = vmatpush1.msra.mxu0 0.0
      %378 = vmatprep.subr.mxu0 0.0
      %379 = vmatpush1.msra.mxu0 0.0
      %380 = vmatprep.subr.mxu0 0.0
      %381 = vmatpush1.msra.mxu0 0.0
      %382 = vmatprep.subr.mxu0 0.0
      %383 = vmatpush1.msra.mxu0 0.0
      %384 = vmatprep.subr.mxu0 0.0
      %385 = vmatpush1.msra.mxu0 0.0
      %386 = vmatprep.subr.mxu0 0.0
      %387 = vmatpush1.msra.mxu0 0.0
      %388 = vmatprep.subr.mxu0 0.0
      %389 = vmatpush1.msra.mxu0 0.0
      %390 = vmatprep.subr.mxu0 0.0
      %391 = vmatpush1.msra.mxu0 0.0
      %392 = vmatprep.subr.mxu0 0.0
      %393 = vmatpush1.msra.mxu0 0.0
      %394 = vmatprep.subr.mxu0 0.0
      %395 = vmatpush1.msra.mxu0 0.0
      %396 = vmatprep.subr.mxu0 0.0
      %397 = vmatpush1.msra.mxu0 0.0
      %398 = vmatprep.subr.mxu0 0.0
      %399 = vmatpush1.msra.mxu0 0.0
      %400 = vmatprep.subr.mxu0 0.0
      %401 = vmatpush1.msra.mxu0 0.0
      %402 = vmatprep.subr.mxu0 0.0
      %403 = vmatpush1.msra.mxu0 0.0
      %404 = vmatprep.subr.mxu0 0.0
      %405 = vmatpush1.msra.mxu0 0.0
      %406 = vmatprep.subr.mxu0 0.0
      %407 = vmatpush1.msra.mxu0 0.0
      %408 = vmatprep.subr.mxu0 0.0
      %409 = vmatpush1.msra.mxu0 0.0
      %410 = vmatprep.subr.mxu0 0.0
      %411 = vmatpush1.msra.mxu0 0.0
      %412 = vmatprep.subr.mxu0 0.0
      %413 = vmatpush1.msra.mxu0 0.0
      %414 = vmatprep.mubr.f32.mxu0 0.0
      %415 = vmatmul.mubr.f32.gmra.mrb[0].mxu0 %v327
      %v416 = vpop.f32.mrb[0].mxu0
      %v417 = vadd.f32 %v288, %v416
      %v418 = vpop.f32.mrb[0].mxu0
      %419 = vmatprep.mubr.f32.mxu0 0.0
      %420 = vmatmul.mubr.f32.gmra.mrb[0].mxu0 %v330
      %v421 = vpop.f32.mrb[0].mxu0
      %v422 = vadd.f32 %v293, %v421
      %v423 = vpop.f32.mrb[0].mxu0
      %424 = vmatprep.mubr.f32.mxu0 0.0
      %425 = vmatmul.mubr.f32.gmra.mrb[0].mxu0 %v333
      %v426 = vpop.f32.mrb[0].mxu0
      %v427 = vadd.f32 %v298, %v426
      %v428 = vpop.f32.mrb[0].mxu0
      %429 = vmatprep.mubr.f32.mxu0 0.0
      %430 = vmatmul.mubr.f32.gmra.mrb[0].mxu0 %v336
      %v431 = vpop.f32.mrb[0].mxu0
      %v432 = vadd.f32 %v303, %v431
      %v433 = vpop.f32.mrb[0].mxu0
      %434 = vmatprep.mubr.f32.mxu0 0.0
      %435 = vmatmul.mubr.f32.gmra.mrb[0].mxu0 %v339
      %v436 = vpop.f32.mrb[0].mxu0
      %v437 = vadd.f32 %v308, %v436
      %v438 = vpop.f32.mrb[0].mxu0
      %439 = vmatprep.mubr.f32.mxu0 0.0
      %440 = vmatmul.mubr.f32.gmra.mrb[0].mxu0 %v342
      %v441 = vpop.f32.mrb[0].mxu0
      %v442 = vadd.f32 %v313, %v441
      %v443 = vpop.f32.mrb[0].mxu0
      %444 = vmatprep.mubr.f32.mxu0 0.0
      %445 = vmatmul.mubr.f32.gmra.mrb[0].mxu0 %v345
      %v446 = vpop.f32.mrb[0].mxu0
      %v447 = vadd.f32 %v318, %v446
      %v448 = vpop.f32.mrb[0].mxu0
      %449 = vmatprep.mubr.f32.mxu0 0.0
      %450 = vmatmul.mubr.f32.gmra.mrb[0].mxu0 %v348
      %v451 = vpop.f32.mrb[0].mxu0
      %v452 = vadd.f32 %v323, %v451
      %v453 = vpop.f32.mrb[0].mxu0
      %454 = vdwg.mxu0
      %v455 = vld [vmem:[%s2] sm:$0x1]
      %v457 = vlaneseq
      %v458 = vshrl.u32 %v457, 7
      %v459 = vsub.s32 0, %v458
      %v460 = vrot.slane %v455, %v459
      %v462 = vadd.f32 %v417, %v460
      %v463 = vadd.f32 %v422, %v460
      %v464 = vadd.f32 %v427, %v460
      %v465 = vadd.f32 %v432, %v460
      %v466 = vadd.f32 %v437, %v460
      %v467 = vadd.f32 %v442, %v460
      %v468 = vadd.f32 %v447, %v460
      %v469 = vadd.f32 %v452, %v460
      %470 = vst.msk [vmem:[%s175] sm:$0xff] %vm196, %v462
      %471 = vst.msk [vmem:[%s175 + $0x8] sm:$0xff] %vm196, %v463
      %472 = vst.msk [vmem:[%s175 + $0x10] sm:$0xff] %vm196, %v464
      %473 = vst.msk [vmem:[%s175 + $0x18] sm:$0xff] %vm196, %v465
      %474 = vst.msk [vmem:[%s175 + $0x20] sm:$0xff] %vm196, %v466
      %475 = vst.msk [vmem:[%s175 + $0x28] sm:$0xff] %vm196, %v467
      %476 = vst.msk [vmem:[%s175 + $0x30] sm:$0xff] %vm196, %v468
      %477 = vst.msk [vmem:[%s175 + $0x38] sm:$0xff] %vm196, %v469
      %s478 = smul.u32 8, %s14
      %p479 = scmp.lt.s32.totalorder %s478, 15
      %s480 = scalar_select %p479, %s478, 15
      %s481 = smul.addr %s480, 8
      %s482 = scalar_lea.vmem %s3, %s481
      // Predicated region
      $region33: #{var_stream_downsampling_block.1} parent=31 // pred_check
        %p483 = pneg %p100
      $region34: #{var_stream_downsampling_block.1} parent=31 // pred_check_branch
        %485 = sbr.rel (%p483) target = $region36
      $region35: #{var_stream_downsampling_block.1} parent=31 // pred_region
        %s486 = smul.u32 8, %s14
      $region36: #{var_stream_downsampling_block.1} parent=31 // pred_fallthru
        _
    $region32: #{var_stream_downsampling_block.1} parent=5 // pred_fallthru
      _
    %p487 = scmp.le.s32.totalorder 2, %s9
    // Predicated region
    $region37: #{var_stream_downsampling_block.1} parent=5 // pred_check
      %p488 = pneg %p487
    $region38: #{var_stream_downsampling_block.1} parent=5 // pred_check_branch
      %490 = sbr.rel (%p488) target = $region40
    $region39: #{var_stream_downsampling_block.1} parent=5 // pred_region
      %s491 = ssub.s32 %s9, 2
      // Predicated region
      $region41: #{var_stream_downsampling_block.1} parent=39 // pred_check
        %p492 = pneg %p106
      $region42: #{var_stream_downsampling_block.1} parent=39 // pred_check_branch
        %494 = sbr.rel (%p492) target = $region44
      $region43: #{var_stream_downsampling_block.1} parent=39 // pred_region
        %s495 = smul.u32 8, %s15
        %p496 = scmp.lt.s32.totalorder %s495, 15
        %s497 = scalar_select %p496, %s495, 15
        %s498 = smul.addr %s497, 8
        %s499 = scalar_lea.vmem %s3, %s498
      $region44: #{var_stream_downsampling_block.1} parent=39 // pred_fallthru
        _
    $region40: #{var_stream_downsampling_block.1} parent=5 // pred_fallthru
      _
  $region6: #{var_stream_downsampling_block.1} parent=0 // loop_footer
    %s13 = sadd.s32 1, %s9
  $region7: #{var_stream_downsampling_block.1} parent=0 // loop_footer_branch
    %8 = sbr.rel target = $region3
  $region8: #{var_stream_downsampling_block.1} parent=0 // loop_exit
    _

</llo_original>
